<compile_context>
chip_gen: v7x
topology: tpu7x:2x2x1
jax: 0.10.0
libtpu: 0.0.40
codegen_flags: <defaults>
</compile_context>

<pallas_src>
import jax
import jax.numpy as jnp
from jax.experimental import pallas as pl
from jax.experimental.pallas import tpu as pltpu


def _grid_sample_kernel(x_ref, g_ref, o_ref):
    # x_ref: (C, H, W)   g_ref: (2, TP)   o_ref: (C, TP)
    C, H, W = x_ref.shape
    TP = g_ref.shape[1]

    g = g_ref[...].astype(jnp.float32)      # (2, TP), lane-dense
    gx = g[0:1, :]                          # (1, TP)  x -> width
    gy = g[1:2, :]                          # (1, TP)  y -> height

    # Unnormalize, align_corners=False.
    ix = ((gx + 1.0) * W - 1.0) * 0.5
    iy = ((gy + 1.0) * H - 1.0) * 0.5
    # Clamp so the int32 conversion is safe for arbitrary grid values; points
    # clamped this far out have BOTH corners outside [0, range), so they never
    # match the integer iota below and contribute 0 (zeros padding).
    ix = jnp.clip(ix, -2.0, W + 1.0)
    iy = jnp.clip(iy, -2.0, H + 1.0)

    x0f = jnp.floor(ix)
    y0f = jnp.floor(iy)
    wx1 = ix - x0f
    wx0 = 1.0 - wx1
    wy1 = iy - y0f
    wy0 = 1.0 - wy1
    x0 = x0f.astype(jnp.int32)
    x1 = x0 + 1
    y0 = y0f.astype(jnp.int32)
    y1 = y0 + 1

    # Separable bilinear weights (exact int32 compares; OOB -> no match -> 0).
    col = jax.lax.broadcasted_iota(jnp.int32, (W, TP), 0)
    row = jax.lax.broadcasted_iota(jnp.int32, (H, TP), 0)
    Cw = jnp.where(col == x0, wx0, 0.0) + jnp.where(col == x1, wx1, 0.0)  # (W, TP)
    Rw = jnp.where(row == y0, wy0, 0.0) + jnp.where(row == y1, wy1, 0.0)  # (H, TP)

    # W contraction on the MXU: (C*H, W) @ (W, TP) -> (C*H, TP).
    xf = x_ref[...].astype(jnp.float32).reshape(C * H, W)
    t = jnp.dot(xf, Cw, preferred_element_type=jnp.float32)               # (C*H, TP)

    # H contraction on the VPU/XLU: multiply by row weights, reduce sublanes.
    out = jnp.sum(t.reshape(C, H, TP) * Rw[None, :, :], axis=1)           # (C, TP)
    o_ref[...] = out.astype(o_ref.dtype)


def _pick_p_tile(P):
    for tp in (512, 256, 128):
        if P % tp == 0:
            return tp
    return P  # full-extent block (allowed even when P is not a multiple of 128)


def grid_sample_pallas(x, m):
    """x: (N, C, H, W) float32, m: (N, Ho, Wo, 2) float32 -> (N, C, Ho, Wo)."""
    N, C, H, W = x.shape
    Ho, Wo = m.shape[1], m.shape[2]
    P = Ho * Wo
    TP = _pick_p_tile(P)
    n_pt = P // TP

    # Grid as (N, 2, P): P becomes the lane dimension inside the kernel.
    g = jnp.transpose(m.reshape(N, P, 2), (0, 2, 1)).astype(jnp.float32)

    itemsize = x.dtype.itemsize
    cost = pl.CostEstimate(
        flops=int(2 * N * C * H * W * P + 2 * N * C * H * P),
        transcendentals=0,
        bytes_accessed=int(x.size * itemsize + g.size * 4 + N * C * P * itemsize),
    )

    out_flat = pl.pallas_call(
        _grid_sample_kernel,
        out_shape=jax.ShapeDtypeStruct((N, C, P), x.dtype),
        grid_spec=pltpu.PrefetchScalarGridSpec(
            num_scalar_prefetch=0,
            grid=(N, n_pt),
            in_specs=[
                # x's block index does not change along the p axis -> fetched
                # once per batch element and kept resident in VMEM.
                pl.BlockSpec((None, C, H, W), lambda n, p: (n, 0, 0, 0)),
                pl.BlockSpec((None, 2, TP), lambda n, p: (n, 0, p)),
            ],
            out_specs=pl.BlockSpec((None, C, TP), lambda n, p: (n, 0, p)),
        ),
        compiler_params=pltpu.CompilerParams(
            dimension_semantics=("parallel", "parallel")),
        cost_estimate=cost,
    )(x, g)

    # Output is already NCHW-ordered: just reshape, no transpose.
    return out_flat.reshape(N, C, Ho, Wo)


# ---- plain-JAX glue: affine_grid equivalent (align_corners=False) ----
def affine_grid(theta, size):
    """theta: (N, 2, 3), size: (N, C, H, W) -> (N, H, W, 2)."""
    N, _, H, W = size
    xs = (jnp.arange(W, dtype=jnp.float32) + 0.5) * (2.0 / W) - 1.0
    ys = (jnp.arange(H, dtype=jnp.float32) + 0.5) * (2.0 / H) - 1.0
    xg, yg = jnp.meshgrid(xs, ys)                       # (H, W) each
    base = jnp.stack([xg, yg, jnp.ones_like(xg)], -1).reshape(H * W, 3)
    grid = jnp.einsum("nij,pj->npi", theta, base)       # (N, H*W, 2)
    return grid.reshape(N, H, W, 2)


# ---- pure-JAX reference (gather formulation) for correctness check ----
def grid_sample_ref(x, m):
    N, C, H, W = x.shape
    Ho, Wo = m.shape[1], m.shape[2]
    gx, gy = m[..., 0], m[..., 1]
    ix = ((gx + 1.0) * W - 1.0) * 0.5
    iy = ((gy + 1.0) * H - 1.0) * 0.5
    x0 = jnp.floor(ix); x1 = x0 + 1.0
    y0 = jnp.floor(iy); y1 = y0 + 1.0
    wx1 = ix - x0; wx0 = 1.0 - wx1
    wy1 = iy - y0; wy0 = 1.0 - wy1
    xf = x.reshape(N, C, H * W)

    def gather(xk, yk, w):
        valid = ((xk >= 0) & (xk <= W - 1) & (yk >= 0) & (yk <= H - 1))
        xi = jnp.clip(xk, 0, W - 1).astype(jnp.int32)
        yi = jnp.clip(yk, 0, H - 1).astype(jnp.int32)
        idx = (yi * W + xi).reshape(N, 1, Ho * Wo)
        idx = jnp.broadcast_to(idx, (N, C, Ho * Wo))
        vals = jnp.take_along_axis(xf, idx, axis=2).reshape(N, C, Ho, Wo)
        wm = (w * valid.astype(x.dtype))[:, None, :, :]
        return vals * wm

    out = (gather(x0, y0, wx0 * wy0) + gather(x1, y0, wx1 * wy0) +
           gather(x0, y1, wx0 * wy1) + gather(x1, y1, wx1 * wy1))
    return out


def _run_case(key, N, C, H, W):
    kx, kt = jax.random.split(key)
    x = jax.random.uniform(kx, (N, C, H, W), dtype=jnp.float32)
    # deterministic affine params: identity + small perturbation
    theta = jnp.broadcast_to(
        jnp.array([[1.0, 0.0, 0.0], [0.0, 1.0, 0.0]], jnp.float32), (N, 2, 3))
    theta = theta + 0.1 * jax.random.normal(kt, (N, 2, 3), dtype=jnp.float32)
    m = affine_grid(theta, (N, C, H, W)).astype(x.dtype)

    out = jax.block_until_ready(grid_sample_pallas(x, m))
    ref = grid_sample_ref(x, m)
    assert out.shape == (N, C, H, W)
    assert jnp.allclose(out, ref, atol=1e-5, rtol=1e-5), \
        float(jnp.max(jnp.abs(out - ref)))


if __name__ == "__main__":
    key = jax.random.PRNGKey(0)
    k1, k2 = jax.random.split(key)

    # Lane-aligned case (P = 256 -> full 128-lane tiles).
    _run_case(k1, N=2, C=4, H=16, W=16)
    # Spec shape from the original module: x = torch.rand(1, 1, 10, 10).
    _run_case(k2, N=1, C=1, H=10, W=10)

    print("KERNEL_OK")
</pallas_src>

<mosaic_0001>
module attributes {stable_mosaic.version = 11 : i64} {
  func.func @_grid_sample_kernel(%arg0: i32, %arg1: i32, %arg2: memref<1x4x16x16xf32, #tpu.memory_space<vmem>>, %arg3: memref<1x2x256xf32, #tpu.memory_space<vmem>>, %arg4: memref<1x4x256xf32, #tpu.memory_space<vmem>>) attributes {dimension_semantics = [#tpu.dimension_semantics<parallel>, #tpu.dimension_semantics<parallel>], iteration_bounds = array<i64: 2, 1>, scalar_prefetch = 0 : i64, scratch_operands = 0 : i64, tpu.core_type = #tpu.core_type<tc>, window_params = [{transform_indices = @transform_0, window_bounds = array<i64: 1, 4, 16, 16>}, {transform_indices = @transform_1, window_bounds = array<i64: 1, 2, 256>}, {transform_indices = @transform_2, window_bounds = array<i64: 1, 4, 256>}]} {
    %c0 = arith.constant 0 : index
    %c0_0 = arith.constant 0 : index
    %c0_1 = arith.constant 0 : index
    %0 = vector.load %arg3[%c0, %c0_0, %c0_1] : memref<1x2x256xf32, #tpu.memory_space<vmem>>, vector<1x2x256xf32>
    %1 = vector.shape_cast %0 : vector<1x2x256xf32> to vector<2x256xf32>
    %2 = vector.extract_strided_slice %1 {offsets = [0, 0], sizes = [1, 256], strides = [1, 1]} : vector<2x256xf32> to vector<1x256xf32>
    %3 = vector.extract_strided_slice %1 {offsets = [1, 0], sizes = [1, 256], strides = [1, 1]} : vector<2x256xf32> to vector<1x256xf32>
    %cst = arith.constant 1.000000e+00 : f32
    %4 = vector.broadcast %cst : f32 to vector<1x256xf32>
    %5 = arith.addf %2, %4 : vector<1x256xf32>
    %cst_2 = arith.constant 1.600000e+01 : f32
    %6 = vector.broadcast %cst_2 : f32 to vector<1x256xf32>
    %7 = arith.mulf %5, %6 : vector<1x256xf32>
    %cst_3 = arith.constant 1.000000e+00 : f32
    %8 = vector.broadcast %cst_3 : f32 to vector<1x256xf32>
    %9 = arith.subf %7, %8 : vector<1x256xf32>
    %cst_4 = arith.constant 5.000000e-01 : f32
    %10 = vector.broadcast %cst_4 : f32 to vector<1x256xf32>
    %11 = arith.mulf %9, %10 : vector<1x256xf32>
    %cst_5 = arith.constant 1.000000e+00 : f32
    %12 = vector.broadcast %cst_5 : f32 to vector<1x256xf32>
    %13 = arith.addf %3, %12 : vector<1x256xf32>
    %cst_6 = arith.constant 1.600000e+01 : f32
    %14 = vector.broadcast %cst_6 : f32 to vector<1x256xf32>
    %15 = arith.mulf %13, %14 : vector<1x256xf32>
    %cst_7 = arith.constant 1.000000e+00 : f32
    %16 = vector.broadcast %cst_7 : f32 to vector<1x256xf32>
    %17 = arith.subf %15, %16 : vector<1x256xf32>
    %cst_8 = arith.constant 5.000000e-01 : f32
    %18 = vector.broadcast %cst_8 : f32 to vector<1x256xf32>
    %19 = arith.mulf %17, %18 : vector<1x256xf32>
    %cst_9 = arith.constant -2.000000e+00 : f32
    %cst_10 = arith.constant 1.700000e+01 : f32
    %20 = vector.broadcast %cst_9 : f32 to vector<1x256xf32>
    %21 = arith.maximumf %20, %11 : vector<1x256xf32>
    %22 = vector.broadcast %cst_10 : f32 to vector<1x256xf32>
    %23 = arith.minimumf %22, %21 : vector<1x256xf32>
    %cst_11 = arith.constant -2.000000e+00 : f32
    %cst_12 = arith.constant 1.700000e+01 : f32
    %24 = vector.broadcast %cst_11 : f32 to vector<1x256xf32>
    %25 = arith.maximumf %24, %19 : vector<1x256xf32>
    %26 = vector.broadcast %cst_12 : f32 to vector<1x256xf32>
    %27 = arith.minimumf %26, %25 : vector<1x256xf32>
    %28 = math.floor %23 : vector<1x256xf32>
    %29 = math.floor %27 : vector<1x256xf32>
    %30 = arith.subf %23, %28 : vector<1x256xf32>
    %cst_13 = arith.constant 1.000000e+00 : f32
    %31 = vector.broadcast %cst_13 : f32 to vector<1x256xf32>
    %32 = arith.subf %31, %30 : vector<1x256xf32>
    %33 = arith.subf %27, %29 : vector<1x256xf32>
    %cst_14 = arith.constant 1.000000e+00 : f32
    %34 = vector.broadcast %cst_14 : f32 to vector<1x256xf32>
    %35 = arith.subf %34, %33 : vector<1x256xf32>
    %36 = arith.fptosi %28 : vector<1x256xf32> to vector<1x256xi32>
    %c1_i32 = arith.constant 1 : i32
    %37 = vector.broadcast %c1_i32 : i32 to vector<1x256xi32>
    %38 = arith.addi %36, %37 : vector<1x256xi32>
    %39 = arith.fptosi %29 : vector<1x256xf32> to vector<1x256xi32>
    %c1_i32_15 = arith.constant 1 : i32
    %40 = vector.broadcast %c1_i32_15 : i32 to vector<1x256xi32>
    %41 = arith.addi %39, %40 : vector<1x256xi32>
    %42 = tpu.iota {dimensions = array<i32: 0>} : vector<16x256xi32>
    %43 = tpu.iota {dimensions = array<i32: 0>} : vector<16x256xi32>
    %44 = vector.broadcast %36 : vector<1x256xi32> to vector<16x256xi32>
    %45 = arith.cmpi eq, %42, %44 : vector<16x256xi32>
    %cst_16 = arith.constant 0.000000e+00 : f32
    %46 = vector.shape_cast %32 : vector<1x256xf32> to vector<1x256xf32>
    %47 = vector.broadcast %46 : vector<1x256xf32> to vector<16x256xf32>
    %48 = vector.broadcast %cst_16 : f32 to vector<16x256xf32>
    %49 = arith.select %45, %47, %48 : vector<16x256xi1>, vector<16x256xf32>
    %50 = vector.broadcast %38 : vector<1x256xi32> to vector<16x256xi32>
    %51 = arith.cmpi eq, %42, %50 : vector<16x256xi32>
    %cst_17 = arith.constant 0.000000e+00 : f32
    %52 = vector.shape_cast %30 : vector<1x256xf32> to vector<1x256xf32>
    %53 = vector.broadcast %52 : vector<1x256xf32> to vector<16x256xf32>
    %54 = vector.broadcast %cst_17 : f32 to vector<16x256xf32>
    %55 = arith.select %51, %53, %54 : vector<16x256xi1>, vector<16x256xf32>
    %56 = arith.addf %49, %55 : vector<16x256xf32>
    %57 = vector.broadcast %39 : vector<1x256xi32> to vector<16x256xi32>
    %58 = arith.cmpi eq, %43, %57 : vector<16x256xi32>
    %cst_18 = arith.constant 0.000000e+00 : f32
    %59 = vector.shape_cast %35 : vector<1x256xf32> to vector<1x256xf32>
    %60 = vector.broadcast %59 : vector<1x256xf32> to vector<16x256xf32>
    %61 = vector.broadcast %cst_18 : f32 to vector<16x256xf32>
    %62 = arith.select %58, %60, %61 : vector<16x256xi1>, vector<16x256xf32>
    %63 = vector.broadcast %41 : vector<1x256xi32> to vector<16x256xi32>
    %64 = arith.cmpi eq, %43, %63 : vector<16x256xi32>
    %cst_19 = arith.constant 0.000000e+00 : f32
    %65 = vector.shape_cast %33 : vector<1x256xf32> to vector<1x256xf32>
    %66 = vector.broadcast %65 : vector<1x256xf32> to vector<16x256xf32>
    %67 = vector.broadcast %cst_19 : f32 to vector<16x256xf32>
    %68 = arith.select %64, %66, %67 : vector<16x256xi1>, vector<16x256xf32>
    %69 = arith.addf %62, %68 : vector<16x256xf32>
    %c0_20 = arith.constant 0 : index
    %c0_21 = arith.constant 0 : index
    %c0_22 = arith.constant 0 : index
    %c0_23 = arith.constant 0 : index
    %70 = vector.load %arg2[%c0_20, %c0_21, %c0_22, %c0_23] : memref<1x4x16x16xf32, #tpu.memory_space<vmem>>, vector<1x4x16x16xf32>
    %71 = vector.shape_cast %70 : vector<1x4x16x16xf32> to vector<4x16x16xf32>
    %72 = vector.shape_cast %71 : vector<4x16x16xf32> to vector<64x16xf32>
    %cst_24 = arith.constant dense<0.000000e+00> : vector<64x256xf32>
    %73 = tpu.matmul %72, %56, %cst_24 {dimension_numbers = #tpu.dot_dimension_numbers<[1], [0], [0], [1], [0, 0, 1, 1], [], []>} : vector<64x16xf32>, vector<16x256xf32>, vector<64x256xf32> -> vector<64x256xf32>
    %74 = vector.shape_cast %73 : vector<64x256xf32> to vector<4x16x256xf32>
    %75 = vector.shape_cast %69 : vector<16x256xf32> to vector<1x16x256xf32>
    %76 = vector.broadcast %75 : vector<1x16x256xf32> to vector<4x16x256xf32>
    %77 = arith.mulf %74, %76 : vector<4x16x256xf32>
    %cst_25 = arith.constant dense<0.000000e+00> : vector<4x256xf32>
    %78 = vector.multi_reduction <add>, %77, %cst_25 [1] : vector<4x16x256xf32> to vector<4x256xf32>
    %c0_26 = arith.constant 0 : index
    %c0_27 = arith.constant 0 : index
    %c0_28 = arith.constant 0 : index
    %79 = vector.load %arg4[%c0_26, %c0_27, %c0_28] : memref<1x4x256xf32, #tpu.memory_space<vmem>>, vector<1x4x256xf32>
    %80 = vector.shape_cast %79 : vector<1x4x256xf32> to vector<4x256xf32>
    %81 = vector.shape_cast %78 : vector<4x256xf32> to vector<1x4x256xf32>
    tpu.vector_store %arg4[%c0_26, %c0_27, %c0_28], %81 {strides = array<i32>} : memref<1x4x256xf32, #tpu.memory_space<vmem>>, vector<1x4x256xf32>,
    return
  }
  func.func @transform_0(%arg0: i32, %arg1: i32) -> (i32, i32, i32, i32) {
    %c0_i32 = arith.constant 0 : i32
    %c0_i32_0 = arith.constant 0 : i32
    %c0_i32_1 = arith.constant 0 : i32
    %c0_i32_2 = arith.constant 0 : i32
    return %arg0, %c0_i32, %c0_i32_0, %c0_i32_1 : i32, i32, i32, i32
  }
  func.func @transform_1(%arg0: i32, %arg1: i32) -> (i32, i32, i32) {
    %c0_i32 = arith.constant 0 : i32
    %c0_i32_0 = arith.constant 0 : i32
    return %arg0, %c0_i32, %arg1 : i32, i32, i32
  }
  func.func @transform_2(%arg0: i32, %arg1: i32) -> (i32, i32, i32) {
    %c0_i32 = arith.constant 0 : i32
    %c0_i32_0 = arith.constant 0 : i32
    return %arg0, %c0_i32, %arg1 : i32, i32, i32
  }
}

</mosaic_0001>

<llo_original>
// kernel: tpu_custom_call.1
$region0: #{tpu_custom_call.1}
  #allocation0 [shape = 'u32[]', space=smem, size = 0x4, offset = 0x4, fixed_abs, tag = 'smem constant byte address 0x4 - core index']
  #allocation1 [shape = 'u32[144,128]{1,0:T(1,128)}', space=vmem, size = 0x12000, scoped, tag = 'internal scratch']
  %s0 = inlined_call_operand.hbm [shape: f32[2,4,16,16], index: 0, kind: input, shape index: {}]
  %s1 = inlined_call_operand.hbm [shape: f32[2,2,256], index: 1, kind: input, shape index: {}]
  %s2 = inlined_call_operand.hbm [shape: f32[2,4,256], index: 2, kind: output, shape index: {}]
  %s3 = sld [smem:[#allocation0]]
  $region49: #{tpu_custom_call.1} parent=0
    _
  %s5 = ssub.s32 1, %s3
  %s6 = scalar_select 0, %s5, %s3
  $region1: #{tpu_custom_call.1} parent=0
    #allocation2 [shape = 'u8[65536]{0}', space=vmem, size = 0x10000, scoped, tag = 'input window, operand 0']
    #allocation3 [shape = 's32[2]{0}', space=sflag, size = 0x8, scoped, tag = 'scoped memory for tpu_custom_call.1']
    #allocation4 [shape = 's32[2]{0}', space=sflag, size = 0x8, scoped, tag = 'scoped memory for tpu_custom_call.1']
    #allocation5 [shape = 'u8[4096]{0}', space=vmem, size = 0x1000, scoped, tag = 'input window, operand 1']
    #allocation6 [shape = 's32[2]{0}', space=sflag, size = 0x8, scoped, tag = 'scoped memory for tpu_custom_call.1']
    #allocation7 [shape = 'u8[8192]{0}', space=vmem, size = 0x2000, scoped, tag = 'output window, operand 0']
    %7 = vsyncpa [#allocation3], 0
    %s8 = scalar_lea.sflag [#allocation3], 1
    %9 = vsyncpa %s8, 0
    %10 = vsyncpa [#allocation6], 0
    %s11 = scalar_lea.sflag [#allocation6], 1
    %12 = vsyncpa %s11, 0
    %13 = vsyncpa [#allocation4], 0
    %s14 = scalar_lea.sflag [#allocation4], 1
    %15 = vsyncpa %s14, 0
    loop: start=0, step=1, limit=4
    $region2: #{tpu_custom_call.1} parent=1 // loop_pre_header
      _
    $region3: #{tpu_custom_call.1} parent=1 // loop_header
      %s17 = sphi 0, %s21
      %p18 = scmp.ge.s32.totalorder %s17, 4
      %s24 = sphi 0, %s36
      %s25 = sphi 0, %s32
      %s26 = sphi 0, %s24
      %s27 = sphi 0, %s25
      %s28 = sphi 0, %s26
      %s29 = sphi 0, %s27
      %s39 = sphi 0, %s41
      %s42 = sphi 0, %s39
      %s43 = sphi 0, %s42
      %s59 = sphi 0, %s43
      %s67 = sphi 0, %s69
      %s70 = sphi 0, %s67
      %s71 = sphi 0, %s70
      %s87 = sphi 0, %s71
      %s95 = sphi 0, %s97
      %s98 = sphi 0, %s95
      %s99 = sphi 0, %s98
      %s115 = sphi 0, %s99
    $region4: #{tpu_custom_call.1} parent=1 // loop_header_branch
      %20 = sbr.rel (%p18) target = $region8
    $region5: #{tpu_custom_call.1} parent=1 // loop_body
      %s22 = ssub.s32 %s17, 1
      %s23 = ssub.s32 %s17, 2
      %s30 = sadd.s32 1, %s25
      %p31 = scmp.ge.s32.totalorder %s30, 1
      %s32 = scalar_select %p31, 0, %s30
      %s33 = sadd.s32 1, %s24
      %s34 = scalar_select %p31, %s33, %s24
      %p35 = scmp.ge.s32.totalorder %s34, 2
      %s36 = scalar_select %p35, 0, %s34
      %s37 = ssub.s32 %s24, %s36
      %p38 = scmp.eq.s32.totalorder %s37, 0
      %s40 = sadd.s32 %s39, 1
      %s41 = scalar_select %p38, %s39, %s40
      %p44 = pneg %p38
      %p45 = scmp.eq.s32.totalorder %s17, 1
      %p46 = por %p44, %p45
      %p47 = scmp.ne.s32.totalorder %s39, %s42
      %p48 = scmp.eq.s32.totalorder %s17, 0
      %p49 = por %p47, %p48
      %p50 = scmp.ne.s32.totalorder %s39, %s42
      %p51 = scmp.eq.s32.totalorder %s22, 1
      %p52 = por %p50, %p51
      %p53 = scmp.ne.s32.totalorder %s42, %s43
      %p54 = scmp.eq.s32.totalorder %s22, 0
      %p55 = por %p53, %p54
      %p56 = scmp.ne.s32.totalorder %s42, %s43
      %p57 = scmp.eq.s32.totalorder %s23, 1
      %p58 = por %p56, %p57
      %p60 = scmp.ne.s32.totalorder %s43, %s59
      %p61 = scmp.eq.s32.totalorder %s23, 0
      %p62 = por %p60, %p61
      %s63 = ssub.s32 %s24, %s36
      %s64 = ssub.s32 %s25, %s32
      %s65 = sor.u32 %s63, %s64
      %p66 = scmp.eq.s32.totalorder %s65, 0
      %s68 = sadd.s32 %s67, 1
      %s69 = scalar_select %p66, %s67, %s68
      %p72 = pneg %p66
      %p73 = scmp.eq.s32.totalorder %s17, 1
      %p74 = por %p72, %p73
      %p75 = scmp.ne.s32.totalorder %s67, %s70
      %p76 = scmp.eq.s32.totalorder %s17, 0
      %p77 = por %p75, %p76
      %p78 = scmp.ne.s32.totalorder %s67, %s70
      %p79 = scmp.eq.s32.totalorder %s22, 1
      %p80 = por %p78, %p79
      %p81 = scmp.ne.s32.totalorder %s70, %s71
      %p82 = scmp.eq.s32.totalorder %s22, 0
      %p83 = por %p81, %p82
      %p84 = scmp.ne.s32.totalorder %s70, %s71
      %p85 = scmp.eq.s32.totalorder %s23, 1
      %p86 = por %p84, %p85
      %p88 = scmp.ne.s32.totalorder %s71, %s87
      %p89 = scmp.eq.s32.totalorder %s23, 0
      %p90 = por %p88, %p89
      %s91 = ssub.s32 %s24, %s36
      %s92 = ssub.s32 %s25, %s32
      %s93 = sor.u32 %s91, %s92
      %p94 = scmp.eq.s32.totalorder %s93, 0
      %s96 = sadd.s32 %s95, 1
      %s97 = scalar_select %p94, %s95, %s96
      %p100 = pneg %p94
      %p101 = scmp.eq.s32.totalorder %s17, 1
      %p102 = por %p100, %p101
      %p103 = scmp.ne.s32.totalorder %s95, %s98
      %p104 = scmp.eq.s32.totalorder %s17, 0
      %p105 = por %p103, %p104
      %p106 = scmp.ne.s32.totalorder %s95, %s98
      %p107 = scmp.eq.s32.totalorder %s22, 1
      %p108 = por %p106, %p107
      %p109 = scmp.ne.s32.totalorder %s98, %s99
      %p110 = scmp.eq.s32.totalorder %s22, 0
      %p111 = por %p109, %p110
      %p112 = scmp.ne.s32.totalorder %s98, %s99
      %p113 = scmp.eq.s32.totalorder %s23, 1
      %p114 = por %p112, %p113
      %p116 = scmp.ne.s32.totalorder %s99, %s115
      %p117 = scmp.eq.s32.totalorder %s23, 0
      %p118 = por %p116, %p117
      %p119 = scmp.le.s32.totalorder 1, %s17
      %p120 = scmp.lt.s32.totalorder %s17, 3
      %p121 = pnand %p119, %p120
      %p122 = pneg %p121
      // Predicated region
      $region9: #{tpu_custom_call.1} parent=5 // pred_check
        _
      $region10: #{tpu_custom_call.1} parent=5 // pred_check_branch
        %124 = sbr.rel (%p121) target = $region12
      $region11: #{tpu_custom_call.1} parent=5 // pred_region
        %s125 = ssub.s32 %s17, 1
      $region12: #{tpu_custom_call.1} parent=5 // pred_fallthru
        _
      %p126 = scmp.lt.s32.totalorder %s17, 2
      // Predicated region
      $region13: #{tpu_custom_call.1} parent=5 // pred_check
        %p127 = pneg %p126
      $region14: #{tpu_custom_call.1} parent=5 // pred_check_branch
        %129 = sbr.rel (%p127) target = $region16
      $region15: #{tpu_custom_call.1} parent=5 // pred_region
        // Predicated region
        $region17: #{tpu_custom_call.1} parent=15 // pred_check
          %p130 = pneg %p49
        $region18: #{tpu_custom_call.1} parent=15 // pred_check_branch
          %132 = sbr.rel (%p130) target = $region20
        $region19: #{tpu_custom_call.1} parent=15 // pred_region
          %s133 = sand.u32 %s39, 1
          %s134 = scalar_lea.sflag [#allocation3], %s133
          %s135 = sand.u32 %s39, 1
          %s136 = smul.addr %s135, 64
          %s137 = scalar_lea.vmem [#allocation2], %s136
          %s139 = ssub.s32 1024, 1024
          %140 = vsyncadd %s134, %s139
          %s141 = smul.addr %s24, 8
          %s142 = smul.addr %s141, 128
          %s143 = scalar_lea.hbm %s0, %s142
          %s144 = sshll.u32 %s137, 4
          %s145 = int_to_ptr.vmem [resolvable:$true] %s144
          %150 = dma.hbm_to_vmem [thread:$0]  %s143, 1024, %s145, %s134, 128, 128, 8
        $region20: #{tpu_custom_call.1} parent=15 // pred_fallthru
          _
        // Predicated region
        $region21: #{tpu_custom_call.1} parent=15 // pred_check
          %p151 = pneg %p77
        $region22: #{tpu_custom_call.1} parent=15 // pred_check_branch
          %153 = sbr.rel (%p151) target = $region24
        $region23: #{tpu_custom_call.1} parent=15 // pred_region
          %s154 = sand.u32 %s67, 1
          %s155 = scalar_lea.sflag [#allocation6], %s154
          %s156 = sand.u32 %s67, 1
          %s157 = smul.addr %s156, 4
          %s158 = scalar_lea.vmem [#allocation5], %s157
          %s159 = smul.u32 2, %s25
          %s161 = ssub.s32 64, 64
          %162 = vsyncadd %s155, %s161
          %s163 = smul.addr %s24, 2
          %s164 = sadd.s32 %s159, %s163
          %s165 = smul.addr %s164, 32
          %s166 = scalar_lea.hbm %s1, %s165
          %s168 = sshll.u32 %s158, 4
          %s169 = int_to_ptr.vmem [resolvable:$true] %s168
          %171 = dma.hbm_to_vmem [thread:$0]  %s166, 64, %s169, %s155
        $region24: #{tpu_custom_call.1} parent=15 // pred_fallthru
          _
      $region16: #{tpu_custom_call.1} parent=5 // pred_fallthru
        _
      %p172 = scmp.le.s32.totalorder 1, %s17
      %p173 = scmp.lt.s32.totalorder %s17, 3
      %p174 = pnand %p172, %p173
      %p175 = pneg %p174
      // Predicated region
      $region25: #{tpu_custom_call.1} parent=5 // pred_check
        _
      $region26: #{tpu_custom_call.1} parent=5 // pred_check_branch
        %177 = sbr.rel (%p174) target = $region28
      $region27: #{tpu_custom_call.1} parent=5 // pred_region
        %s178 = ssub.s32 %s17, 1
        %s179 = sand.u32 %s42, 1
        %s180 = scalar_lea.sflag [#allocation3], %s179
        %s181 = sand.u32 %s42, 1
        %s182 = smul.addr %s181, 64
        %s183 = scalar_lea.vmem [#allocation2], %s182
        // Predicated region
        $region29: #{tpu_custom_call.1} parent=27 // pred_check
          %p184 = pneg %p55
        $region30: #{tpu_custom_call.1} parent=27 // pred_check_branch
          %186 = sbr.rel (%p184) target = $region32
        $region31: #{tpu_custom_call.1} parent=27 // pred_region
          %187 = dma.done %s180, 1024
        $region32: #{tpu_custom_call.1} parent=27 // pred_fallthru
          _
        %s188 = sand.u32 %s70, 1
        %s189 = scalar_lea.sflag [#allocation6], %s188
        %s190 = sand.u32 %s70, 1
        %s191 = smul.addr %s190, 4
        %s192 = scalar_lea.vmem [#allocation5], %s191
        // Predicated region
        $region33: #{tpu_custom_call.1} parent=27 // pred_check
          %p193 = pneg %p83
        $region34: #{tpu_custom_call.1} parent=27 // pred_check_branch
          %195 = sbr.rel (%p193) target = $region36
        $region35: #{tpu_custom_call.1} parent=27 // pred_region
          %196 = dma.done %s189, 64
        $region36: #{tpu_custom_call.1} parent=27 // pred_fallthru
          _
        %s197 = sand.u32 %s42, 1
        %s198 = scalar_lea.sflag [#allocation3], %s197
        %s199 = sand.u32 %s42, 1
        %s200 = smul.addr %s199, 64
        %s201 = scalar_lea.vmem [#allocation2], %s200
        %p202 = pneg %p55
        %p203 = pneg %p52
        %s204 = sand.u32 %s70, 1
        %s205 = scalar_lea.sflag [#allocation6], %s204
        %s206 = sand.u32 %s70, 1
        %s207 = smul.addr %s206, 4
        %s208 = scalar_lea.vmem [#allocation5], %s207
        %p209 = pneg %p83
        %p210 = pneg %p80
        %p211 = pneg %p111
        %p212 = pneg %p108
        %s213 = sand.u32 %s98, 1
        %s214 = scalar_lea.sflag [#allocation4], %s213
        %s215 = sand.u32 %s98, 1
        %s216 = smul.addr %s215, 8
        %s217 = scalar_lea.vmem [#allocation7], %s216
        %s218 = smul.u32 2, %s27
        %s219 = smul.u32 2, %s27
        %v220 = vld [vmem:[%s192] sm:$0xf]
        %v221 = vadd.f32 %v220, 1.0
        %v222 = vmul.f32 %v221, 16.0
        %v223 = vsub.f32 %v222, 1.0
        %v224 = vmul.f32 %v223, 0.5
        %v225 = vmax.f32 %v224, -2.0
        %v226 = vmin.f32 %v225, 17.0
        %v227 = vfloor.f32 %v226
        %v228 = vsub.f32 %v226, %v227
        %v229 = vsub.f32 1.0, %v228
        %v230 = vcvt.f32.s32.to.zero.pseudo %v227
        %v231 = vadd.s32 %v230, 1
        %v232 = vlaneseq
        %v233 = vshrl.u32 %v232, 7
        %v234 = vadd.s32 %v233, 8
        %v235 = vlaneseq
        %v236 = vshrl.u32 %v235, 7
        %v237 = vsub.s32 0, %v236
        %v238 = vrot.slane %v230, %v237
        %v239 = vlaneseq
        %v240 = vshrl.u32 %v239, 7
        %v241 = vsub.s32 2, %v240
        %v242 = vrot.slane %v230, %v241
        %v243 = vlaneseq
        %v244 = vshrl.u32 %v243, 7
        %v245 = vsub.s32 0, %v244
        %v246 = vrot.slane %v238, %v245
        %v247 = vlaneseq
        %v248 = vshrl.u32 %v247, 7
        %v249 = vsub.s32 0, %v248
        %v250 = vrot.slane %v242, %v249
        %vm251 = vcmp.eq.s32.totalorder %v233, %v246
        %vm252 = vcmp.eq.s32.totalorder %v233, %v250
        %vm253 = vcmp.eq.s32.totalorder %v234, %v246
        %vm254 = vcmp.eq.s32.totalorder %v234, %v250
        %v256 = vlaneseq
        %v257 = vshrl.u32 %v256, 7
        %v258 = vsub.s32 0, %v257
        %v259 = vrot.slane %v229, %v258
        %v260 = vlaneseq
        %v261 = vshrl.u32 %v260, 7
        %v262 = vsub.s32 2, %v261
        %v263 = vrot.slane %v229, %v262
        %v266 = vlaneseq
        %v267 = vshrl.u32 %v266, 7
        %v268 = vsub.s32 0, %v267
        %v269 = vrot.slane %v259, %v268
        %v270 = vlaneseq
        %v271 = vshrl.u32 %v270, 7
        %v272 = vsub.s32 0, %v271
        %v273 = vrot.slane %v263, %v272
        %v274 = vsel %vm251, %v269, 0.0
        %v275 = vsel %vm252, %v273, 0.0
        %v276 = vsel %vm253, %v269, 0.0
        %v277 = vsel %vm254, %v273, 0.0
        %v278 = vlaneseq
        %v279 = vshrl.u32 %v278, 7
        %v280 = vsub.s32 0, %v279
        %v281 = vrot.slane %v231, %v280
        %v282 = vlaneseq
        %v283 = vshrl.u32 %v282, 7
        %v284 = vsub.s32 2, %v283
        %v285 = vrot.slane %v231, %v284
        %v286 = vlaneseq
        %v287 = vshrl.u32 %v286, 7
        %v288 = vsub.s32 0, %v287
        %v289 = vrot.slane %v281, %v288
        %v290 = vlaneseq
        %v291 = vshrl.u32 %v290, 7
        %v292 = vsub.s32 0, %v291
        %v293 = vrot.slane %v285, %v292
        %vm294 = vcmp.eq.s32.totalorder %v233, %v289
        %vm295 = vcmp.eq.s32.totalorder %v233, %v293
        %vm296 = vcmp.eq.s32.totalorder %v234, %v289
        %vm297 = vcmp.eq.s32.totalorder %v234, %v293
        %v299 = vlaneseq
        %v300 = vshrl.u32 %v299, 7
        %v301 = vsub.s32 0, %v300
        %v302 = vrot.slane %v228, %v301
        %v303 = vlaneseq
        %v304 = vshrl.u32 %v303, 7
        %v305 = vsub.s32 2, %v304
        %v306 = vrot.slane %v228, %v305
        %v309 = vlaneseq
        %v310 = vshrl.u32 %v309, 7
        %v311 = vsub.s32 0, %v310
        %v312 = vrot.slane %v302, %v311
        %v313 = vlaneseq
        %v314 = vshrl.u32 %v313, 7
        %v315 = vsub.s32 0, %v314
        %v316 = vrot.slane %v306, %v315
        %v317 = vsel %vm294, %v312, 0.0
        %v318 = vsel %vm295, %v316, 0.0
        %v319 = vsel %vm296, %v312, 0.0
        %v320 = vsel %vm297, %v316, 0.0
        %v321 = vadd.f32 %v274, %v317
        %v322 = vadd.f32 %v275, %v318
        %v323 = vadd.f32 %v276, %v319
        %v324 = vadd.f32 %v277, %v320
        %v325 = vlaneseq
        %v326 = vshrl.u32 %v325, 7
        %v327 = vsub.s32 1, %v326
        %v328 = vrot.slane %v230, %v327
        %v329 = vlaneseq
        %v330 = vshrl.u32 %v329, 7
        %v331 = vsub.s32 3, %v330
        %v332 = vrot.slane %v230, %v331
        %v333 = vlaneseq
        %v334 = vshrl.u32 %v333, 7
        %v335 = vsub.s32 1, %v334
        %v336 = vrot.slane %v328, %v335
        %v337 = vlaneseq
        %v338 = vshrl.u32 %v337, 7
        %v339 = vsub.s32 1, %v338
        %v340 = vrot.slane %v332, %v339
        %vm341 = vcmp.eq.s32.totalorder %v233, %v336
        %vm342 = vcmp.eq.s32.totalorder %v233, %v340
        %vm343 = vcmp.eq.s32.totalorder %v234, %v336
        %vm344 = vcmp.eq.s32.totalorder %v234, %v340
        %v345 = vlaneseq
        %v346 = vshrl.u32 %v345, 7
        %v347 = vsub.s32 1, %v346
        %v348 = vrot.slane %v229, %v347
        %v349 = vlaneseq
        %v350 = vshrl.u32 %v349, 7
        %v351 = vsub.s32 3, %v350
        %v352 = vrot.slane %v229, %v351
        %v355 = vlaneseq
        %v356 = vshrl.u32 %v355, 7
        %v357 = vsub.s32 1, %v356
        %v358 = vrot.slane %v348, %v357
        %v359 = vlaneseq
        %v360 = vshrl.u32 %v359, 7
        %v361 = vsub.s32 1, %v360
        %v362 = vrot.slane %v352, %v361
        %v363 = vsel %vm341, %v358, 0.0
        %v364 = vsel %vm342, %v362, 0.0
        %v365 = vsel %vm343, %v358, 0.0
        %v366 = vsel %vm344, %v362, 0.0
        %v367 = vlaneseq
        %v368 = vshrl.u32 %v367, 7
        %v369 = vsub.s32 1, %v368
        %v370 = vrot.slane %v231, %v369
        %v371 = vlaneseq
        %v372 = vshrl.u32 %v371, 7
        %v373 = vsub.s32 3, %v372
        %v374 = vrot.slane %v231, %v373
        %v375 = vlaneseq
        %v376 = vshrl.u32 %v375, 7
        %v377 = vsub.s32 1, %v376
        %v378 = vrot.slane %v370, %v377
        %v379 = vlaneseq
        %v380 = vshrl.u32 %v379, 7
        %v381 = vsub.s32 1, %v380
        %v382 = vrot.slane %v374, %v381
        %vm383 = vcmp.eq.s32.totalorder %v233, %v378
        %vm384 = vcmp.eq.s32.totalorder %v233, %v382
        %vm385 = vcmp.eq.s32.totalorder %v234, %v378
        %vm386 = vcmp.eq.s32.totalorder %v234, %v382
        %v387 = vlaneseq
        %v388 = vshrl.u32 %v387, 7
        %v389 = vsub.s32 1, %v388
        %v390 = vrot.slane %v228, %v389
        %v391 = vlaneseq
        %v392 = vshrl.u32 %v391, 7
        %v393 = vsub.s32 3, %v392
        %v394 = vrot.slane %v228, %v393
        %v397 = vlaneseq
        %v398 = vshrl.u32 %v397, 7
        %v399 = vsub.s32 1, %v398
        %v400 = vrot.slane %v390, %v399
        %v401 = vlaneseq
        %v402 = vshrl.u32 %v401, 7
        %v403 = vsub.s32 1, %v402
        %v404 = vrot.slane %v394, %v403
        %v405 = vsel %vm383, %v400, 0.0
        %v406 = vsel %vm384, %v404, 0.0
        %v407 = vsel %vm385, %v400, 0.0
        %v408 = vsel %vm386, %v404, 0.0
        %v409 = vadd.f32 %v363, %v405
        %v410 = vadd.f32 %v364, %v406
        %v411 = vadd.f32 %v365, %v407
        %v412 = vadd.f32 %v366, %v408
        %v413 = vld [vmem:[%s183] sm:$0xff]
        %v414 = vld [vmem:[%s183 + $0x8] sm:$0xff]
        %v415 = vld [vmem:[%s183 + $0x10] sm:$0xff]
        %v416 = vld [vmem:[%s183 + $0x18] sm:$0xff]
        %v417 = vld [vmem:[%s183 + $0x20] sm:$0xff]
        %v418 = vld [vmem:[%s183 + $0x28] sm:$0xff]
        %v419 = vld [vmem:[%s183 + $0x30] sm:$0xff]
        %v420 = vld [vmem:[%s183 + $0x38] sm:$0xff]
        %vm421 = vcmask 130048
        %v423 = vsel %vm421, %v413, 0
        %v426 = vsel %vm421, %v414, 0
        %v429 = vsel %vm421, %v415, 0
        %v432 = vsel %vm421, %v416, 0
        %v435 = vsel %vm421, %v417, 0
        %v438 = vsel %vm421, %v418, 0
        %v441 = vsel %vm421, %v419, 0
        %v444 = vsel %vm421, %v420, 0
        %446 = vmatprep.subr.mxu0 %v322
        %447 = vmatpush1.msra.mxu0 %v321
        %448 = vmatprep.subr.mxu0 %v324
        %449 = vmatpush1.msra.mxu0 %v323
        %450 = vmatprep.subr.mxu0 0.0
        %451 = vmatpush1.msra.mxu0 0.0
        %452 = vmatprep.subr.mxu0 0.0
        %453 = vmatpush1.msra.mxu0 0.0
        %454 = vmatprep.subr.mxu0 0.0
        %455 = vmatpush1.msra.mxu0 0.0
        %456 = vmatprep.subr.mxu0 0.0
        %457 = vmatpush1.msra.mxu0 0.0
        %458 = vmatprep.subr.mxu0 0.0
        %459 = vmatpush1.msra.mxu0 0.0
        %460 = vmatprep.subr.mxu0 0.0
        %461 = vmatpush1.msra.mxu0 0.0
        %462 = vmatprep.subr.mxu0 0.0
        %463 = vmatpush1.msra.mxu0 0.0
        %464 = vmatprep.subr.mxu0 0.0
        %465 = vmatpush1.msra.mxu0 0.0
        %466 = vmatprep.subr.mxu0 0.0
        %467 = vmatpush1.msra.mxu0 0.0
        %468 = vmatprep.subr.mxu0 0.0
        %469 = vmatpush1.msra.mxu0 0.0
        %470 = vmatprep.subr.mxu0 0.0
        %471 = vmatpush1.msra.mxu0 0.0
        %472 = vmatprep.subr.mxu0 0.0
        %473 = vmatpush1.msra.mxu0 0.0
        %474 = vmatprep.subr.mxu0 0.0
        %475 = vmatpush1.msra.mxu0 0.0
        %476 = vmatprep.subr.mxu0 0.0
        %477 = vmatpush1.msra.mxu0 0.0
        %478 = vmatprep.subr.mxu0 0.0
        %479 = vmatpush1.msra.mxu0 0.0
        %480 = vmatprep.subr.mxu0 0.0
        %481 = vmatpush1.msra.mxu0 0.0
        %482 = vmatprep.subr.mxu0 0.0
        %483 = vmatpush1.msra.mxu0 0.0
        %484 = vmatprep.subr.mxu0 0.0
        %485 = vmatpush1.msra.mxu0 0.0
        %486 = vmatprep.subr.mxu0 0.0
        %487 = vmatpush1.msra.mxu0 0.0
        %488 = vmatprep.subr.mxu0 0.0
        %489 = vmatpush1.msra.mxu0 0.0
        %490 = vmatprep.subr.mxu0 0.0
        %491 = vmatpush1.msra.mxu0 0.0
        %492 = vmatprep.subr.mxu0 0.0
        %493 = vmatpush1.msra.mxu0 0.0
        %494 = vmatprep.subr.mxu0 0.0
        %495 = vmatpush1.msra.mxu0 0.0
        %496 = vmatprep.subr.mxu0 0.0
        %497 = vmatpush1.msra.mxu0 0.0
        %498 = vmatprep.subr.mxu0 0.0
        %499 = vmatpush1.msra.mxu0 0.0
        %500 = vmatprep.subr.mxu0 0.0
        %501 = vmatpush1.msra.mxu0 0.0
        %502 = vmatprep.subr.mxu0 0.0
        %503 = vmatpush1.msra.mxu0 0.0
        %504 = vmatprep.subr.mxu0 0.0
        %505 = vmatpush1.msra.mxu0 0.0
        %506 = vmatprep.subr.mxu0 0.0
        %507 = vmatpush1.msra.mxu0 0.0
        %508 = vmatprep.subr.mxu0 0.0
        %509 = vmatpush1.msra.mxu0 0.0
        %510 = vmatprep.mubr.f32.mxu0 0.0
        %511 = vmatmul.mubr.f32.gmra.mrb[0].mxu0 %v423
        %v512 = vpop.f32.mrb[0].mxu0
        %v513 = vadd.f32 0.0, %v512
        %v514 = vpop.f32.mrb[0].mxu0
        %v515 = vadd.f32 0.0, %v514
        %516 = vmatprep.mubr.f32.mxu0 0.0
        %517 = vmatmul.mubr.f32.gmra.mrb[0].mxu0 %v426
        %v518 = vpop.f32.mrb[0].mxu0
        %v519 = vadd.f32 0.0, %v518
        %v520 = vpop.f32.mrb[0].mxu0
        %v521 = vadd.f32 0.0, %v520
        %522 = vmatprep.mubr.f32.mxu0 0.0
        %523 = vmatmul.mubr.f32.gmra.mrb[0].mxu0 %v429
        %v524 = vpop.f32.mrb[0].mxu0
        %v525 = vadd.f32 0.0, %v524
        %v526 = vpop.f32.mrb[0].mxu0
        %v527 = vadd.f32 0.0, %v526
        %528 = vmatprep.mubr.f32.mxu0 0.0
        %529 = vmatmul.mubr.f32.gmra.mrb[0].mxu0 %v432
        %v530 = vpop.f32.mrb[0].mxu0
        %v531 = vadd.f32 0.0, %v530
        %v532 = vpop.f32.mrb[0].mxu0
        %v533 = vadd.f32 0.0, %v532
        %534 = vmatprep.mubr.f32.mxu0 0.0
        %535 = vmatmul.mubr.f32.gmra.mrb[0].mxu0 %v435
        %v536 = vpop.f32.mrb[0].mxu0
        %v537 = vadd.f32 0.0, %v536
        %v538 = vpop.f32.mrb[0].mxu0
        %v539 = vadd.f32 0.0, %v538
        %540 = vmatprep.mubr.f32.mxu0 0.0
        %541 = vmatmul.mubr.f32.gmra.mrb[0].mxu0 %v438
        %v542 = vpop.f32.mrb[0].mxu0
        %v543 = vadd.f32 0.0, %v542
        %v544 = vpop.f32.mrb[0].mxu0
        %v545 = vadd.f32 0.0, %v544
        %546 = vmatprep.mubr.f32.mxu0 0.0
        %547 = vmatmul.mubr.f32.gmra.mrb[0].mxu0 %v441
        %v548 = vpop.f32.mrb[0].mxu0
        %v549 = vadd.f32 0.0, %v548
        %v550 = vpop.f32.mrb[0].mxu0
        %v551 = vadd.f32 0.0, %v550
        %552 = vmatprep.mubr.f32.mxu0 0.0
        %553 = vmatmul.mubr.f32.gmra.mrb[0].mxu0 %v444
        %v554 = vpop.f32.mrb[0].mxu0
        %v555 = vadd.f32 0.0, %v554
        %v556 = vpop.f32.mrb[0].mxu0
        %v557 = vadd.f32 0.0, %v556
        %558 = vdwg.mxu0
        %v559 = vmul.f32 %v513, %v409
        %v560 = vmul.f32 %v515, %v410
        %v561 = vmul.f32 %v519, %v411
        %v562 = vmul.f32 %v521, %v412
        %v563 = vmul.f32 %v525, %v409
        %v564 = vmul.f32 %v527, %v410
        %v565 = vmul.f32 %v531, %v411
        %v566 = vmul.f32 %v533, %v412
        %v567 = vmul.f32 %v537, %v409
        %v568 = vmul.f32 %v539, %v410
        %v569 = vmul.f32 %v543, %v411
        %v570 = vmul.f32 %v545, %v412
        %v571 = vmul.f32 %v549, %v409
        %v572 = vmul.f32 %v551, %v410
        %v573 = vmul.f32 %v555, %v411
        %v574 = vmul.f32 %v557, %v412
        %v575 = vadd.f32 %v559, %v561
        %v576 = vrot.slane %v575, 4
        %v577 = vadd.f32 %v575, %v576
        %v578 = vrot.slane %v577, 2
        %v579 = vadd.f32 %v577, %v578
        %v580 = vrot.slane %v579, 1
        %v581 = vadd.f32 %v579, %v580
        %v582 = vadd.f32 %v560, %v562
        %v583 = vrot.slane %v582, 4
        %v584 = vadd.f32 %v582, %v583
        %v585 = vrot.slane %v584, 2
        %v586 = vadd.f32 %v584, %v585
        %v587 = vrot.slane %v586, 1
        %v588 = vadd.f32 %v586, %v587
        %v589 = vadd.f32 %v563, %v565
        %v590 = vrot.slane %v589, 4
        %v591 = vadd.f32 %v589, %v590
        %v592 = vrot.slane %v591, 2
        %v593 = vadd.f32 %v591, %v592
        %v594 = vrot.slane %v593, 1
        %v595 = vadd.f32 %v593, %v594
        %v596 = vadd.f32 %v564, %v566
        %v597 = vrot.slane %v596, 4
        %v598 = vadd.f32 %v596, %v597
        %v599 = vrot.slane %v598, 2
        %v600 = vadd.f32 %v598, %v599
        %v601 = vrot.slane %v600, 1
        %v602 = vadd.f32 %v600, %v601
        %v603 = vadd.f32 %v567, %v569
        %v604 = vrot.slane %v603, 4
        %v605 = vadd.f32 %v603, %v604
        %v606 = vrot.slane %v605, 2
        %v607 = vadd.f32 %v605, %v606
        %v608 = vrot.slane %v607, 1
        %v609 = vadd.f32 %v607, %v608
        %v610 = vadd.f32 %v568, %v570
        %v611 = vrot.slane %v610, 4
        %v612 = vadd.f32 %v610, %v611
        %v613 = vrot.slane %v612, 2
        %v614 = vadd.f32 %v612, %v613
        %v615 = vrot.slane %v614, 1
        %v616 = vadd.f32 %v614, %v615
        %v617 = vadd.f32 %v571, %v573
        %v618 = vrot.slane %v617, 4
        %v619 = vadd.f32 %v617, %v618
        %v620 = vrot.slane %v619, 2
        %v621 = vadd.f32 %v619, %v620
        %v622 = vrot.slane %v621, 1
        %v623 = vadd.f32 %v621, %v622
        %v624 = vadd.f32 %v572, %v574
        %v625 = vrot.slane %v624, 4
        %v626 = vadd.f32 %v624, %v625
        %v627 = vrot.slane %v626, 2
        %v628 = vadd.f32 %v626, %v627
        %v629 = vrot.slane %v628, 1
        %v630 = vadd.f32 %v628, %v629
        %v639 = vcombine.low %v581, %v588
        %v640 = vcombine.low %v595, %v602
        %v641 = vcombine.low %v609, %v616
        %v642 = vcombine.low %v623, %v630
        %v643 = vrot.slane %v640, 7
        %vm644 = vcmask 1041409
        %v645 = vsel %vm644, %v643, %v639
        %vm646 = vcmask 1045509
        %v647 = vsel %vm646, %v643, %v645
        %v648 = vrot.slane %v641, 6
        %vm649 = vcmask 1042434
        %v650 = vsel %vm649, %v648, %v647
        %vm651 = vcmask 1046534
        %v652 = vsel %vm651, %v648, %v650
        %v653 = vrot.slane %v642, 5
        %vm654 = vcmask 1043459
        %v655 = vsel %vm654, %v653, %v652
        %vm656 = vcmask 1047559
        %v657 = vsel %vm656, %v653, %v655
        %659 = vst [vmem:[%s217] sm:$0xff] %v657
        %s660 = sand.u32 %s98, 1
        %s661 = scalar_lea.sflag [#allocation4], %s660
        %s662 = sand.u32 %s98, 1
        %s663 = smul.addr %s662, 8
        %s664 = scalar_lea.vmem [#allocation7], %s663
        // Predicated region
        $region37: #{tpu_custom_call.1} parent=27 // pred_check
          %p665 = pneg %p108
        $region38: #{tpu_custom_call.1} parent=27 // pred_check_branch
          %667 = sbr.rel (%p665) target = $region40
        $region39: #{tpu_custom_call.1} parent=27 // pred_region
          %s668 = smul.u32 2, %s27
          %s670 = ssub.s32 128, 128
          %671 = vsyncadd %s661, %s670
          %s672 = smul.addr %s26, 2
          %s673 = sadd.s32 %s668, %s672
          %s674 = smul.addr %s673, 64
          %s675 = scalar_lea.hbm %s2, %s674
          %s677 = sshll.u32 %s664, 4
          %s678 = int_to_ptr.vmem [resolvable:$true] %s677
          %680 = dma.vmem_to_hbm [thread:$0]  %s678, 128, %s675, %s661
        $region40: #{tpu_custom_call.1} parent=27 // pred_fallthru
          _
      $region28: #{tpu_custom_call.1} parent=5 // pred_fallthru
        _
      %p681 = scmp.le.s32.totalorder 2, %s17
      // Predicated region
      $region41: #{tpu_custom_call.1} parent=5 // pred_check
        %p682 = pneg %p681
      $region42: #{tpu_custom_call.1} parent=5 // pred_check_branch
        %684 = sbr.rel (%p682) target = $region44
      $region43: #{tpu_custom_call.1} parent=5 // pred_region
        %s685 = ssub.s32 %s17, 2
        // Predicated region
        $region45: #{tpu_custom_call.1} parent=43 // pred_check
          %p686 = pneg %p114
        $region46: #{tpu_custom_call.1} parent=43 // pred_check_branch
          %688 = sbr.rel (%p686) target = $region48
        $region47: #{tpu_custom_call.1} parent=43 // pred_region
          %s689 = sand.u32 %s99, 1
          %s690 = scalar_lea.sflag [#allocation4], %s689
          %s691 = sand.u32 %s99, 1
          %s692 = smul.addr %s691, 8
          %s693 = scalar_lea.vmem [#allocation7], %s692
          %694 = dma.done %s690, 128
        $region48: #{tpu_custom_call.1} parent=43 // pred_fallthru
          _
      $region44: #{tpu_custom_call.1} parent=5 // pred_fallthru
        _
    $region6: #{tpu_custom_call.1} parent=1 // loop_footer
      %s21 = sadd.s32 1, %s17
    $region7: #{tpu_custom_call.1} parent=1 // loop_footer_branch
      %16 = sbr.rel target = $region3
    $region8: #{tpu_custom_call.1} parent=1 // loop_exit
      _
    %695 = vsyncpa [#allocation3], 1
    %s696 = scalar_lea.sflag [#allocation3], 1
    %697 = vsyncpa %s696, 1
    %698 = vsyncpa [#allocation6], 1
    %s699 = scalar_lea.sflag [#allocation6], 1
    %700 = vsyncpa %s699, 1
    %701 = vsyncpa [#allocation4], 1
    %s702 = scalar_lea.sflag [#allocation4], 1
    %703 = vsyncpa %s702, 1

</llo_original>
